<compile_context>
chip_gen: v5e
topology: v5e:2x2
jax: 0.10.0
libtpu: 0.0.40
codegen_flags: <defaults>
</compile_context>

<pallas_src>
import functools

import jax
import jax.numpy as jnp
from jax.experimental import pallas as pl
from jax.experimental.pallas import tpu as pltpu

INPUT_DIM = 20
H1_DIM = 100
H1_PAD = 104          # padded hidden width: multiple of 8 (sublane axis)
OUTPUT_DIM = 1


def _mlp_kernel(x_ref, w1_ref, b1_ref, w2_ref, b2_ref, o_ref):
    # x_ref : (TB, INPUT_DIM)        -- native row-major input tile
    # w1_ref: (H1_PAD, INPUT_DIM)    b1_ref: (H1_PAD, 1)
    # w2_ref: (OUTPUT_DIM, H1_PAD)   b2_ref: (OUTPUT_DIM, 1)
    # o_ref : (OUTPUT_DIM, TB)       -- transposed, lane-dense output
    #
    # First linear: contract over INPUT_DIM (dim 1 of both operands), i.e. the
    # MXU does the transpose of x; result is hidden in (H1_PAD, TB) layout.
    h = jax.lax.dot_general(
        w1_ref[...], x_ref[...],
        dimension_numbers=(((1,), (1,)), ((), ())),
        preferred_element_type=jnp.float32)
    h = jnp.tanh(h + b1_ref[...])                       # (H1_PAD, TB), EUP-bound
    # Second linear + sigmoid -> lane-dense (1, TB) row.
    y = jnp.dot(w2_ref[...], h, preferred_element_type=jnp.float32)
    y = y + b2_ref[...]                                 # (OUTPUT_DIM, TB)
    o_ref[...] = jax.nn.sigmoid(y).astype(o_ref.dtype)


def _round_up(x, m):
    return ((x + m - 1) // m) * m


def pad_params(w1, b1, w2, b2):
    """Pad H1 (100 -> 104) once, outside the per-call forward.
    PyTorch nn.Linear layout: w1 (H1, IN), b1 (H1,), w2 (OUT, H1), b2 (OUT,)."""
    w1p = jnp.zeros((H1_PAD, INPUT_DIM), jnp.float32).at[:H1_DIM].set(w1)
    b1p = jnp.zeros((H1_PAD, 1), jnp.float32).at[:H1_DIM, 0].set(b1)
    w2p = jnp.zeros((OUTPUT_DIM, H1_PAD), jnp.float32).at[:, :H1_DIM].set(w2)
    b2p = b2.reshape(OUTPUT_DIM, 1).astype(jnp.float32)
    return w1p, b1p, w2p, b2p


@functools.partial(jax.jit, static_argnames=("tb",))
def neural_net_forward(x, w1p, b1p, w2p, b2p, *, tb=8192):
    """x: (B, INPUT_DIM) f32; padded params from pad_params().
    Returns (B, OUTPUT_DIM) f32 = sigmoid(tanh(x W1^T + b1) W2^T + b2)."""
    assert tb % 128 == 0
    B = x.shape[0]

    # Pad batch only to a multiple of 128 (NOT to a multiple of tb).
    b_pad = _round_up(B, 128)
    if b_pad != B:
        x = jnp.pad(x, ((0, b_pad - B), (0, 0)))
    tb_eff = min(tb, b_pad)
    grid = (pl.cdiv(b_pad, tb_eff),)   # ragged last block handled by Pallas

    cost = pl.CostEstimate(
        flops=2 * b_pad * (INPUT_DIM * H1_PAD + H1_PAD * OUTPUT_DIM),
        transcendentals=b_pad * (H1_PAD + OUTPUT_DIM),
        bytes_accessed=4 * (b_pad * INPUT_DIM + b_pad * OUTPUT_DIM
                            + H1_PAD * INPUT_DIM + H1_PAD
                            + OUTPUT_DIM * H1_PAD + OUTPUT_DIM),
    )

    yT = pl.pallas_call(
        _mlp_kernel,
        out_shape=jax.ShapeDtypeStruct((OUTPUT_DIM, b_pad), jnp.float32),
        grid_spec=pltpu.PrefetchScalarGridSpec(
            num_scalar_prefetch=0,
            grid=grid,
            in_specs=[
                pl.BlockSpec((tb_eff, INPUT_DIM), lambda i: (i, 0)),    # x (native layout)
                pl.BlockSpec((H1_PAD, INPUT_DIM), lambda i: (0, 0)),    # W1 (resident)
                pl.BlockSpec((H1_PAD, 1), lambda i: (0, 0)),            # b1 (resident)
                pl.BlockSpec((OUTPUT_DIM, H1_PAD), lambda i: (0, 0)),   # W2 (resident)
                pl.BlockSpec((OUTPUT_DIM, 1), lambda i: (0, 0)),        # b2 (resident)
            ],
            out_specs=pl.BlockSpec((OUTPUT_DIM, tb_eff), lambda i: (0, i)),
        ),
        compiler_params=pltpu.CompilerParams(
            dimension_semantics=("parallel",),
        ),
        cost_estimate=cost,
    )(x, w1p, b1p, w2p, b2p)

    # Back to (B, OUTPUT_DIM), dropping batch padding columns.
    return yT[:, :B].T


def init_params(key):
    """Deterministic init matching nn.Linear shapes (PyTorch layout)."""
    k1, k2, k3, k4 = jax.random.split(key, 4)
    bound1 = 1.0 / jnp.sqrt(INPUT_DIM)
    bound2 = 1.0 / jnp.sqrt(H1_DIM)
    w1 = jax.random.uniform(k1, (H1_DIM, INPUT_DIM), jnp.float32, -bound1, bound1)
    b1 = jax.random.uniform(k2, (H1_DIM,), jnp.float32, -bound1, bound1)
    w2 = jax.random.uniform(k3, (OUTPUT_DIM, H1_DIM), jnp.float32, -bound2, bound2)
    b2 = jax.random.uniform(k4, (OUTPUT_DIM,), jnp.float32, -bound2, bound2)
    return w1, b1, w2, b2


if __name__ == "__main__":
    # TODO(synk): RMSprop optimizer / training loop is not part of the forward
    # pass and is intentionally not implemented in Pallas.
    key = jax.random.PRNGKey(0)
    kx, kp = jax.random.split(key)

    B = 8  # small example batch (kernel pads batch internally to 128)
    x = jax.random.normal(kx, (B, INPUT_DIM), dtype=jnp.float32)
    w1, b1, w2, b2 = init_params(kp)
    w1p, b1p, w2p, b2p = pad_params(w1, b1, w2, b2)   # pad once, outside forward

    out = neural_net_forward(x, w1p, b1p, w2p, b2p)
    out = jax.block_until_ready(out)

    # Reference check in plain JAX (same math as the PyTorch forward).
    ref = jax.nn.sigmoid(jnp.tanh(x @ w1.T + b1) @ w2.T + b2)
    assert out.shape == (B, OUTPUT_DIM)
    assert jnp.allclose(out, ref, atol=1e-5), "mismatch vs reference"

    print("KERNEL_OK")
</pallas_src>

<mosaic_0001>
module attributes {stable_mosaic.version = 11 : i64} {
  func.func @_mlp_kernel(%arg0: i32, %arg1: memref<128x20xf32, #tpu.memory_space<vmem>>, %arg2: memref<104x20xf32, #tpu.memory_space<vmem>>, %arg3: memref<104x1xf32, #tpu.memory_space<vmem>>, %arg4: memref<1x104xf32, #tpu.memory_space<vmem>>, %arg5: memref<1x1xf32, #tpu.memory_space<vmem>>, %arg6: memref<1x128xf32, #tpu.memory_space<vmem>>) attributes {dimension_semantics = [#tpu.dimension_semantics<parallel>], iteration_bounds = array<i64: 1>, scalar_prefetch = 0 : i64, scratch_operands = 0 : i64, tpu.core_type = #tpu.core_type<tc>, window_params = [{transform_indices = @transform_0, window_bounds = array<i64: 128, 20>}, {pipeline_mode = #tpu.pipeline_mode<synchronous>, transform_indices = @transform_1, window_bounds = array<i64: 104, 20>}, {pipeline_mode = #tpu.pipeline_mode<synchronous>, transform_indices = @transform_2, window_bounds = array<i64: 104, 1>}, {pipeline_mode = #tpu.pipeline_mode<synchronous>, transform_indices = @transform_3, window_bounds = array<i64: 1, 104>}, {pipeline_mode = #tpu.pipeline_mode<synchronous>, transform_indices = @transform_4, window_bounds = array<i64: 1, 1>}, {transform_indices = @transform_5, window_bounds = array<i64: 1, 128>}]} {
    %c0 = arith.constant 0 : index
    %c0_0 = arith.constant 0 : index
    %0 = vector.load %arg2[%c0, %c0_0] : memref<104x20xf32, #tpu.memory_space<vmem>>, vector<104x20xf32>
    %c0_1 = arith.constant 0 : index
    %c0_2 = arith.constant 0 : index
    %1 = vector.load %arg1[%c0_1, %c0_2] : memref<128x20xf32, #tpu.memory_space<vmem>>, vector<128x20xf32>
    %cst = arith.constant dense<0.000000e+00> : vector<104x128xf32>
    %2 = tpu.matmul %0, %1, %cst {dimension_numbers = #tpu.dot_dimension_numbers<[1], [1], [0], [0], [0, 0, 1, 0], [], []>} : vector<104x20xf32>, vector<128x20xf32>, vector<104x128xf32> -> vector<104x128xf32>
    %c0_3 = arith.constant 0 : index
    %c0_4 = arith.constant 0 : index
    %3 = vector.load %arg3[%c0_3, %c0_4] : memref<104x1xf32, #tpu.memory_space<vmem>>, vector<104x1xf32>
    %4 = vector.broadcast %3 : vector<104x1xf32> to vector<104x128xf32>
    %5 = arith.addf %2, %4 : vector<104x128xf32>
    %6 = math.tanh %5 : vector<104x128xf32>
    %c0_5 = arith.constant 0 : index
    %c0_6 = arith.constant 0 : index
    %7 = vector.load %arg4[%c0_5, %c0_6] : memref<1x104xf32, #tpu.memory_space<vmem>>, vector<1x104xf32>
    %cst_7 = arith.constant dense<0.000000e+00> : vector<1x128xf32>
    %8 = tpu.matmul %7, %6, %cst_7 {dimension_numbers = #tpu.dot_dimension_numbers<[1], [0], [0], [1], [0, 0, 1, 1], [], []>} : vector<1x104xf32>, vector<104x128xf32>, vector<1x128xf32> -> vector<1x128xf32>
    %c0_8 = arith.constant 0 : index
    %c0_9 = arith.constant 0 : index
    %9 = vector.load %arg5[%c0_8, %c0_9] : memref<1x1xf32, #tpu.memory_space<vmem>>, vector<1x1xf32>
    %10 = vector.broadcast %9 : vector<1x1xf32> to vector<1x128xf32>
    %11 = arith.addf %8, %10 : vector<1x128xf32>
    %12 = arith.negf %11 : vector<1x128xf32>
    %13 = math.exp %12 : vector<1x128xf32>
    %cst_10 = arith.constant 1.000000e+00 : f32
    %14 = vector.broadcast %cst_10 : f32 to vector<1x128xf32>
    %15 = arith.addf %14, %13 : vector<1x128xf32>
    %16 = arith.divf %14, %15 : vector<1x128xf32>
    %c0_11 = arith.constant 0 : index
    %c0_12 = arith.constant 0 : index
    %17 = vector.load %arg6[%c0_11, %c0_12] : memref<1x128xf32, #tpu.memory_space<vmem>>, vector<1x128xf32>
    tpu.vector_store %arg6[%c0_11, %c0_12], %16 {strides = array<i32>} : memref<1x128xf32, #tpu.memory_space<vmem>>, vector<1x128xf32>,
    return
  }
  func.func @transform_0(%arg0: i32) -> (i32, i32) {
    %c0_i32 = arith.constant 0 : i32
    %c0_i32_0 = arith.constant 0 : i32
    return %arg0, %c0_i32 : i32, i32
  }
  func.func @transform_1(%arg0: i32) -> (i32, i32) {
    %c0_i32 = arith.constant 0 : i32
    %c0_i32_0 = arith.constant 0 : i32
    %c0_i32_1 = arith.constant 0 : i32
    return %c0_i32, %c0_i32_0 : i32, i32
  }
  func.func @transform_2(%arg0: i32) -> (i32, i32) {
    %c0_i32 = arith.constant 0 : i32
    %c0_i32_0 = arith.constant 0 : i32
    %c0_i32_1 = arith.constant 0 : i32
    return %c0_i32, %c0_i32_0 : i32, i32
  }
  func.func @transform_3(%arg0: i32) -> (i32, i32) {
    %c0_i32 = arith.constant 0 : i32
    %c0_i32_0 = arith.constant 0 : i32
    %c0_i32_1 = arith.constant 0 : i32
    return %c0_i32, %c0_i32_0 : i32, i32
  }
  func.func @transform_4(%arg0: i32) -> (i32, i32) {
    %c0_i32 = arith.constant 0 : i32
    %c0_i32_0 = arith.constant 0 : i32
    %c0_i32_1 = arith.constant 0 : i32
    return %c0_i32, %c0_i32_0 : i32, i32
  }
  func.func @transform_5(%arg0: i32) -> (i32, i32) {
    %c0_i32 = arith.constant 0 : i32
    %c0_i32_0 = arith.constant 0 : i32
    return %c0_i32, %arg0 : i32, i32
  }
}

</mosaic_0001>

<llo_original>
// kernel: neural_net_forward.1
$region0: #{neural_net_forward.1}
  #allocation0 [shape = 'u32[]', space=smem, size = 0x4, offset = 0x4, fixed_abs, tag = 'smem constant byte address 0x4 - core index']
  #allocation1 [shape = 'u32[72,128]{1,0:T(1,128)}', space=vmem, size = 0x9000, scoped, tag = 'internal scratch']
  #allocation2 [shape = 'f32[1,1]{1,0:T(1,128)S(1)}', space=vmem, size = 0x200, scoped, tag = 'scoped memory for neural_net_forward.1']
  %s0 = inlined_call_operand.vmem [shape: f32[128,20], index: 0, kind: input, shape index: {}]
  %s1 = inlined_call_operand.vmem [shape: f32[104,20], index: 1, kind: input, shape index: {}]
  %s2 = inlined_call_operand.vmem [shape: f32[104,1], index: 2, kind: input, shape index: {}]
  %s3 = inlined_call_operand.vmem [shape: f32[1,104], index: 3, kind: input, shape index: {}]
  %s4 = inlined_call_operand.<no memory space> [shape: f32[1,1], index: 4, kind: input, shape index: {}]
  %s5 = inlined_call_operand.vmem [shape: f32[1,128], index: 5, kind: output, shape index: {}]
  %s6 = sld [smem:[#allocation0]]
  $region30: #{neural_net_forward.1} parent=0
    _
  %s8 = ssub.s32 1, %s6
  %s9 = scalar_select 0, %s8, %s6
  %v10 = vstv %s4
  %11 = vst [vmem:[#allocation2] sm:$0x1] %v10
  // Predicated region
  $region2: #{neural_net_forward.1} parent=0 // pred_check
    _
  $region3: #{neural_net_forward.1} parent=0 // pred_check_branch
    %13 = sbr.rel (0) target = $region5
  $region4: #{neural_net_forward.1} parent=0 // pred_region
    _
  $region5: #{neural_net_forward.1} parent=0 // pred_fallthru
    _
  // Predicated region
  $region6: #{neural_net_forward.1} parent=0 // pred_check
    _
  $region7: #{neural_net_forward.1} parent=0 // pred_check_branch
    %15 = sbr.rel (0) target = $region9
  $region8: #{neural_net_forward.1} parent=0 // pred_region
    _
  $region9: #{neural_net_forward.1} parent=0 // pred_fallthru
    _
  // Predicated region
  $region10: #{neural_net_forward.1} parent=0 // pred_check
    _
  $region11: #{neural_net_forward.1} parent=0 // pred_check_branch
    %17 = sbr.rel (0) target = $region13
  $region12: #{neural_net_forward.1} parent=0 // pred_region
    _
  $region13: #{neural_net_forward.1} parent=0 // pred_fallthru
    _
  // Predicated region
  $region14: #{neural_net_forward.1} parent=0 // pred_check
    _
  $region15: #{neural_net_forward.1} parent=0 // pred_check_branch
    %19 = sbr.rel (0) target = $region17
  $region16: #{neural_net_forward.1} parent=0 // pred_region
    _
  $region17: #{neural_net_forward.1} parent=0 // pred_fallthru
    _
  // Predicated region
  $region18: #{neural_net_forward.1} parent=0 // pred_check
    _
  $region19: #{neural_net_forward.1} parent=0 // pred_check_branch
    %21 = sbr.rel (0) target = $region21
  $region20: #{neural_net_forward.1} parent=0 // pred_region
    _
  $region21: #{neural_net_forward.1} parent=0 // pred_fallthru
    _
  %v22 = vld [vmem:[%s1] sm:$0xff]
  %v23 = vld [vmem:[%s1 + $0x8] sm:$0xff]
  %v24 = vld [vmem:[%s1 + $0x10] sm:$0xff]
  %v25 = vld [vmem:[%s1 + $0x18] sm:$0xff]
  %v26 = vld [vmem:[%s1 + $0x20] sm:$0xff]
  %v27 = vld [vmem:[%s1 + $0x28] sm:$0xff]
  %v28 = vld [vmem:[%s1 + $0x30] sm:$0xff]
  %v29 = vld [vmem:[%s1 + $0x38] sm:$0xff]
  %v30 = vld [vmem:[%s1 + $0x40] sm:$0xff]
  %v31 = vld [vmem:[%s1 + $0x48] sm:$0xff]
  %v32 = vld [vmem:[%s1 + $0x50] sm:$0xff]
  %v33 = vld [vmem:[%s1 + $0x58] sm:$0xff]
  %v34 = vld [vmem:[%s1 + $0x60] sm:$0xff]
  %v35 = vld [vmem:[%s0] sm:$0xff]
  %v36 = vld [vmem:[%s0 + $0x8] sm:$0xff]
  %v37 = vld [vmem:[%s0 + $0x10] sm:$0xff]
  %v38 = vld [vmem:[%s0 + $0x18] sm:$0xff]
  %v39 = vld [vmem:[%s0 + $0x20] sm:$0xff]
  %v40 = vld [vmem:[%s0 + $0x28] sm:$0xff]
  %v41 = vld [vmem:[%s0 + $0x30] sm:$0xff]
  %v42 = vld [vmem:[%s0 + $0x38] sm:$0xff]
  %v43 = vld [vmem:[%s0 + $0x40] sm:$0xff]
  %v44 = vld [vmem:[%s0 + $0x48] sm:$0xff]
  %v45 = vld [vmem:[%s0 + $0x50] sm:$0xff]
  %v46 = vld [vmem:[%s0 + $0x58] sm:$0xff]
  %v47 = vld [vmem:[%s0 + $0x60] sm:$0xff]
  %v48 = vld [vmem:[%s0 + $0x68] sm:$0xff]
  %v49 = vld [vmem:[%s0 + $0x70] sm:$0xff]
  %v50 = vld [vmem:[%s0 + $0x78] sm:$0xff]
  %v51 = vld [vmem:[%s2] sm:$0xff]
  %v52 = vld [vmem:[%s2 + $0x8] sm:$0xff]
  %v53 = vld [vmem:[%s2 + $0x10] sm:$0xff]
  %v54 = vld [vmem:[%s2 + $0x18] sm:$0xff]
  %v55 = vld [vmem:[%s2 + $0x20] sm:$0xff]
  %v56 = vld [vmem:[%s2 + $0x28] sm:$0xff]
  %v57 = vld [vmem:[%s2 + $0x30] sm:$0xff]
  %v58 = vld [vmem:[%s2 + $0x38] sm:$0xff]
  %v59 = vld [vmem:[%s2 + $0x40] sm:$0xff]
  %v60 = vld [vmem:[%s2 + $0x48] sm:$0xff]
  %v61 = vld [vmem:[%s2 + $0x50] sm:$0xff]
  %v62 = vld [vmem:[%s2 + $0x58] sm:$0xff]
  %v63 = vld [vmem:[%s2 + $0x60] sm:$0xff]
  %65 = vset.pattern.permute.xlu0 0
  %66 = vperm.xlu0 %65, %v51
  %v67 = vpop.permute.xlu0 %66
  %70 = vset.pattern.permute.xlu0 0
  %71 = vperm.xlu0 %70, %v52
  %v72 = vpop.permute.xlu0 %71
  %75 = vset.pattern.permute.xlu0 0
  %76 = vperm.xlu0 %75, %v53
  %v77 = vpop.permute.xlu0 %76
  %80 = vset.pattern.permute.xlu0 0
  %81 = vperm.xlu0 %80, %v54
  %v82 = vpop.permute.xlu0 %81
  %85 = vset.pattern.permute.xlu0 0
  %86 = vperm.xlu0 %85, %v55
  %v87 = vpop.permute.xlu0 %86
  %90 = vset.pattern.permute.xlu0 0
  %91 = vperm.xlu0 %90, %v56
  %v92 = vpop.permute.xlu0 %91
  %95 = vset.pattern.permute.xlu0 0
  %96 = vperm.xlu0 %95, %v57
  %v97 = vpop.permute.xlu0 %96
  %100 = vset.pattern.permute.xlu0 0
  %101 = vperm.xlu0 %100, %v58
  %v102 = vpop.permute.xlu0 %101
  %105 = vset.pattern.permute.xlu0 0
  %106 = vperm.xlu0 %105, %v59
  %v107 = vpop.permute.xlu0 %106
  %110 = vset.pattern.permute.xlu0 0
  %111 = vperm.xlu0 %110, %v60
  %v112 = vpop.permute.xlu0 %111
  %115 = vset.pattern.permute.xlu0 0
  %116 = vperm.xlu0 %115, %v61
  %v117 = vpop.permute.xlu0 %116
  %120 = vset.pattern.permute.xlu0 0
  %121 = vperm.xlu0 %120, %v62
  %v122 = vpop.permute.xlu0 %121
  %125 = vset.pattern.permute.xlu0 0
  %126 = vperm.xlu0 %125, %v63
  %v127 = vpop.permute.xlu0 %126
  %vm129 = vcmask 162816
  %v131 = vsel %vm129, %v22, 0
  %v134 = vsel %vm129, %v23, 0
  %v137 = vsel %vm129, %v24, 0
  %v140 = vsel %vm129, %v25, 0
  %v143 = vsel %vm129, %v26, 0
  %v146 = vsel %vm129, %v27, 0
  %v149 = vsel %vm129, %v28, 0
  %v152 = vsel %vm129, %v29, 0
  %v155 = vsel %vm129, %v30, 0
  %v158 = vsel %vm129, %v31, 0
  %v161 = vsel %vm129, %v32, 0
  %v164 = vsel %vm129, %v33, 0
  %v167 = vsel %vm129, %v34, 0
  %v170 = vsel %vm129, %v35, 0
  %v173 = vsel %vm129, %v36, 0
  %v176 = vsel %vm129, %v37, 0
  %v179 = vsel %vm129, %v38, 0
  %v182 = vsel %vm129, %v39, 0
  %v185 = vsel %vm129, %v40, 0
  %v188 = vsel %vm129, %v41, 0
  %v191 = vsel %vm129, %v42, 0
  %v194 = vsel %vm129, %v43, 0
  %v197 = vsel %vm129, %v44, 0
  %v200 = vsel %vm129, %v45, 0
  %v203 = vsel %vm129, %v46, 0
  %v206 = vsel %vm129, %v47, 0
  %v209 = vsel %vm129, %v48, 0
  %v212 = vsel %vm129, %v49, 0
  %v215 = vsel %vm129, %v50, 0
  %217 = vmatpush.xpose.msra.mxu0 %v215
  %218 = vmatpush.xpose.msra.mxu0 %v212
  %219 = vmatpush.xpose.msra.mxu0 %v209
  %220 = vmatpush.xpose.msra.mxu0 %v206
  %221 = vmatpush.xpose.msra.mxu0 %v203
  %222 = vmatpush.xpose.msra.mxu0 %v200
  %223 = vmatpush.xpose.msra.mxu0 %v197
  %224 = vmatpush.xpose.msra.mxu0 %v194
  %225 = vmatpush.xpose.msra.mxu0 %v191
  %226 = vmatpush.xpose.msra.mxu0 %v188
  %227 = vmatpush.xpose.msra.mxu0 %v185
  %228 = vmatpush.xpose.msra.mxu0 %v182
  %229 = vmatpush.xpose.msra.mxu0 %v179
  %230 = vmatpush.xpose.msra.mxu0 %v176
  %231 = vmatpush.xpose.msra.mxu0 %v173
  %232 = vmatpush.xpose.msra.mxu0 %v170
  %233 = vmatmul.f32.gmra.mxu0 %v131
  %v234 = vpop.f32.mrf.mxu0
  %v235 = vadd.f32 %v67, %v234
  %236 = vmatmul.f32.gmra.mxu0 %v134
  %v237 = vpop.f32.mrf.mxu0
  %v238 = vadd.f32 %v72, %v237
  %239 = vmatmul.f32.gmra.mxu0 %v137
  %v240 = vpop.f32.mrf.mxu0
  %v241 = vadd.f32 %v77, %v240
  %242 = vmatmul.f32.gmra.mxu0 %v140
  %v243 = vpop.f32.mrf.mxu0
  %v244 = vadd.f32 %v82, %v243
  %245 = vmatmul.f32.gmra.mxu0 %v143
  %v246 = vpop.f32.mrf.mxu0
  %v247 = vadd.f32 %v87, %v246
  %248 = vmatmul.f32.gmra.mxu0 %v146
  %v249 = vpop.f32.mrf.mxu0
  %v250 = vadd.f32 %v92, %v249
  %251 = vmatmul.f32.gmra.mxu0 %v149
  %v252 = vpop.f32.mrf.mxu0
  %v253 = vadd.f32 %v97, %v252
  %254 = vmatmul.f32.gmra.mxu0 %v152
  %v255 = vpop.f32.mrf.mxu0
  %v256 = vadd.f32 %v102, %v255
  %257 = vmatmul.f32.gmra.mxu0 %v155
  %v258 = vpop.f32.mrf.mxu0
  %v259 = vadd.f32 %v107, %v258
  %260 = vmatmul.f32.gmra.mxu0 %v158
  %v261 = vpop.f32.mrf.mxu0
  %v262 = vadd.f32 %v112, %v261
  %263 = vmatmul.f32.gmra.mxu0 %v161
  %v264 = vpop.f32.mrf.mxu0
  %v265 = vadd.f32 %v117, %v264
  %266 = vmatmul.f32.gmra.mxu0 %v164
  %v267 = vpop.f32.mrf.mxu0
  %v268 = vadd.f32 %v122, %v267
  %269 = vmatmul.f32.gmra.mxu0 %v167
  %v270 = vpop.f32.mrf.mxu0
  %v271 = vadd.f32 %v127, %v270
  %272 = vdwg.mxu0
  %v273 = vtanh.pop %v235
  %v274 = vtanh.pop %v238
  %v275 = vtanh.pop %v241
  %v276 = vtanh.pop %v244
  %v277 = vtanh.pop %v247
  %v278 = vtanh.pop %v250
  %v279 = vtanh.pop %v253
  %v280 = vtanh.pop %v256
  %v281 = vtanh.pop %v259
  %v282 = vtanh.pop %v262
  %v283 = vtanh.pop %v265
  %v284 = vtanh.pop %v268
  %v285 = vtanh.pop %v271
  %v286 = vld [vmem:[%s3] sm:$0x1]
  %v287 = vld [vmem:[#allocation2] sm:$0x1]
  %289 = vset.pattern.permute.xlu0 0
  %290 = vperm.xlu0 %289, %v287
  %v291 = vpop.permute.xlu0 %290
  %v293 = vperm.slane %v291, 0
  %vm294 = vcmask 850944
  %v296 = vsel %vm294, %v286, 0
  %298 = vmatpush.msra.mxu0 0.0
  %299 = vmatpush.msra.mxu0 0.0
  %300 = vmatpush.msra.mxu0 0.0
  %301 = vmatpush.msra.mxu0 %v285
  %302 = vmatpush.msra.mxu0 %v284
  %303 = vmatpush.msra.mxu0 %v283
  %304 = vmatpush.msra.mxu0 %v282
  %305 = vmatpush.msra.mxu0 %v281
  %306 = vmatpush.msra.mxu0 %v280
  %307 = vmatpush.msra.mxu0 %v279
  %308 = vmatpush.msra.mxu0 %v278
  %309 = vmatpush.msra.mxu0 %v277
  %310 = vmatpush.msra.mxu0 %v276
  %311 = vmatpush.msra.mxu0 %v275
  %312 = vmatpush.msra.mxu0 %v274
  %313 = vmatpush.msra.mxu0 %v273
  %314 = vmatmul.f32.gmra.mxu0 %v296
  %v315 = vpop.f32.mrf.mxu0
  %v316 = vadd.f32 %v293, %v315
  %317 = vdwg.mxu0
  %v318 = vxor.u32 %v316, 2147483648
  %v319 = vmul.f32 %v318, 1.442695
  %v320 = vpow.pop %v319
  %v321 = vadd.f32 %v320, 1.0
  %v322 = vrcp.pop %v321
  %v323 = vmul.f32 %v321, %v322
  %v324 = vsub.f32 1.0, %v323
  %v325 = vmul.f32 %v322, %v324
  %v326 = vadd.f32 %v322, %v325
  %vm327 = vweird.f32 %v321
  %vm328 = vweird.f32 %v322
  %vm329 = vmor %vm327, %vm328
  %v330 = vsel %vm329, %v322, %v326
  %v331 = vand.u32 2147483647, %v321
  %vm332 = vcmp.eq.f32.partialorder %v331, 8.507059e+37
  %v333 = vand.u32 %v321, 2147483648
  %v334 = vor.u32 1.1754944e-38, %v333
  %v335 = vsel %vm332, %v334, %v330
  %v336 = vmul.f32 1.0, %v335
  %337 = vst [vmem:[%s5] sm:$0x1] %v336
  // Predicated region
  $region22: #{neural_net_forward.1} parent=0 // pred_check
    _
  $region23: #{neural_net_forward.1} parent=0 // pred_check_branch
    %339 = sbr.rel (0) target = $region25
  $region24: #{neural_net_forward.1} parent=0 // pred_region
    _
  $region25: #{neural_net_forward.1} parent=0 // pred_fallthru
    _
  // Predicated region
  $region26: #{neural_net_forward.1} parent=0 // pred_check
    _
  $region27: #{neural_net_forward.1} parent=0 // pred_check_branch
    %341 = sbr.rel (0) target = $region29
  $region28: #{neural_net_forward.1} parent=0 // pred_region
    _
  $region29: #{neural_net_forward.1} parent=0 // pred_fallthru
    _

</llo_original>
